<compile_context>
chip_gen: v7x
topology: tpu7x:2x2x1
jax: 0.10.0
libtpu: 0.0.40
codegen_flags: <defaults>
</compile_context>

<pallas_src>
import jax
import jax.numpy as jnp
from jax import lax
from jax.experimental import pallas as pl
from jax.experimental.pallas import tpu as pltpu


def _round_up(x, m):
    return ((x + m - 1) // m) * m


def _make_opl_kernel(*, b_valid, b_pad, tile_b, gamma, no_norm):
    def kernel(feat_hbm, row_lab_ref, col_lab_ref,            # inputs
               loss_ref, pos_ref, neg_ref,                    # outputs
               fnorm_ref, pos_col_ref, neg_col_ref,           # scratch
               cnt_col_ref, diag_ref):
        i = pl.program_id(0)

        # ---- init (grid step 0): one HBM->VMEM DMA, normalize in place, zero accs.
        @pl.when(i == 0)
        def _init():
            pltpu.sync_copy(feat_hbm, fnorm_ref)              # single copy of features
            f = fnorm_ref[...]
            if not no_norm:
                norm = jnp.sqrt(jnp.sum(f * f, axis=1, keepdims=True))   # (Bp, 1)
                f = f / jnp.maximum(norm, 1e-12)              # F.normalize semantics
                fnorm_ref[...] = f
            # Exact Gram diagonal total: diag(G)[r] == ||f_r||^2 (padded rows are 0).
            diag_ref[...] = jnp.sum(f * f, keepdims=True)
            pos_col_ref[...] = jnp.zeros_like(pos_col_ref)
            neg_col_ref[...] = jnp.zeros_like(neg_col_ref)
            cnt_col_ref[...] = jnp.zeros_like(cnt_col_ref)

        # ---- this step's (TB, Bp) row tile of the Gram matrix (MXU).
        row_start = pl.multiple_of(i * tile_b, tile_b)
        f_rows = fnorm_ref[pl.ds(row_start, tile_b), :]        # (TB, D)
        gram = lax.dot_general(
            f_rows, fnorm_ref[...],
            dimension_numbers=(((1,), (1,)), ((), ())),        # contract feature dim
            preferred_element_type=jnp.float32)                # (TB, Bp)

        # Same-class mask via broadcast compare; padded labels are unique so padded
        # rows only self-match (and their features are zero -> contribute 0 to sums).
        same = row_lab_ref[...] == col_lab_ref[...]            # (TB, Bp) bool

        # Per-column partial sums: collapse the sublane axis only; the cross-lane
        # reduction to a scalar is deferred to the finalize step.
        pos_col_ref[...] += jnp.sum(jnp.where(same, gram, 0.0),
                                    axis=0, keepdims=True)
        neg_col_ref[...] += jnp.sum(jnp.where(same, 0.0, jnp.abs(gram)),
                                    axis=0, keepdims=True)
        cnt_col_ref[...] += jnp.sum(jnp.where(same, 1.0, 0.0),
                                    axis=0, keepdims=True)

        # ---- finalize on the last grid step.
        @pl.when(i == pl.num_programs(0) - 1)
        def _finalize():
            total_same = jnp.sum(cnt_col_ref[...], keepdims=True)        # (1, 1)
            # Every row (valid or padded) self-matches exactly once -> subtract b_pad.
            pos_cnt = total_same - float(b_pad)
            # Valid neg pairs = b^2 - sum_c n_c^2 ; padded rows add (b_pad - b) to
            # total_same only via their own diagonal.
            neg_cnt = float(b_valid * b_valid + b_pad - b_valid) - total_same
            pos_sum = jnp.sum(pos_col_ref[...], keepdims=True) - diag_ref[...]
            neg_sum = jnp.sum(neg_col_ref[...], keepdims=True)
            pos_mean = pos_sum / (pos_cnt + 1e-6)
            neg_mean = neg_sum / (neg_cnt + 1e-6)
            pos_ref[...] = pos_mean
            neg_ref[...] = neg_mean
            loss_ref[...] = (1.0 - pos_mean) + gamma * neg_mean

    return kernel


def orthogonal_projection_loss(features, labels, *, gamma=2.0, no_norm=False):
    """features: (B, D) float, labels: (B,) int -> (loss, pos_pairs_mean, neg_pairs_mean)."""
    # TODO(synk): use_attention=True path (features <- softmax(F @ F.T) @ F) is not
    # implemented; this kernel covers the module's default use_attention=False.
    # TODO(synk): for very large B on v7x (64 MiB VMEM), add a column-streaming 2-D grid
    # and a 2-TensorCore core-parallel row split (requires per-core init/accumulators).
    b, d = features.shape
    b_pad = _round_up(b, 128)                    # lane-dense Gram columns
    tile_b = 256 if (b_pad % 256 == 0 and b_pad >= 256) else 128
    tile_b = min(tile_b, b_pad)
    grid = b_pad // tile_b

    features = features.astype(jnp.float32)      # fnorm scratch kept in f32 for accuracy
    labels = labels.astype(jnp.int32)
    pad = b_pad - b
    if pad:
        features = jnp.pad(features, ((0, pad), (0, 0)))
        # Unique labels for padded rows: they only match themselves, keeping counts exact.
        pad_labels = jnp.max(labels) + 1 + jnp.arange(pad, dtype=jnp.int32)
        labels = jnp.concatenate([labels, pad_labels])

    row_labels = labels.reshape(b_pad, 1)        # per-tile row labels (sublane-major)
    col_labels = labels.reshape(1, b_pad)        # resident column labels (lane-major)

    kernel = _make_opl_kernel(b_valid=b, b_pad=b_pad, tile_b=tile_b,
                              gamma=float(gamma), no_norm=bool(no_norm))

    # Explicit scoped-VMEM budget: resident fnorm slab + gram-tile temporaries + misc,
    # capped at 64 MiB so it is legal on v7x while leaving v5e/v6e plenty of headroom.
    fnorm_bytes = b_pad * d * 4
    gram_bytes = tile_b * b_pad * 4
    misc_bytes = 3 * 8 * b_pad * 4 + 2 * tile_b * 128 * 4 + 2 * 8 * b_pad * 4
    need = fnorm_bytes + 4 * gram_bytes + misc_bytes + (4 << 20)
    vmem_limit = int(min(64 * 1024 * 1024, max(need, 16 * 1024 * 1024)))

    scalar_spec = pl.BlockSpec((1, 1), lambda i: (0, 0))
    out_shapes = tuple(jax.ShapeDtypeStruct((1, 1), jnp.float32) for _ in range(3))

    loss, pos_mean, neg_mean = pl.pallas_call(
        kernel,
        out_shape=out_shapes,
        grid_spec=pltpu.PrefetchScalarGridSpec(
            num_scalar_prefetch=0,
            grid=(grid,),
            in_specs=[
                pl.BlockSpec(memory_space=pl.ANY),              # features stay in HBM
                pl.BlockSpec((tile_b, 1), lambda i: (i, 0)),    # row labels per tile
                pl.BlockSpec((1, b_pad), lambda i: (0, 0)),     # column labels (resident)
            ],
            out_specs=(scalar_spec, scalar_spec, scalar_spec),
            scratch_shapes=[
                pltpu.VMEM((b_pad, d), jnp.float32),   # normalized features (single copy)
                pltpu.VMEM((1, b_pad), jnp.float32),   # per-column pos partial sums
                pltpu.VMEM((1, b_pad), jnp.float32),   # per-column neg partial sums
                pltpu.VMEM((1, b_pad), jnp.float32),   # per-column same-pair counts
                pltpu.VMEM((1, 1), jnp.float32),       # Gram diagonal total
            ],
        ),
        compiler_params=pltpu.CompilerParams(
            dimension_semantics=("arbitrary",),        # accumulators carried across grid
            vmem_limit_bytes=vmem_limit),
    )(features, row_labels, col_labels)

    return loss[0, 0], pos_mean[0, 0], neg_mean[0, 0]


if __name__ == "__main__":
    batch, feat_dim, num_classes = 8, 32, 4
    gamma = 2.0

    key = jax.random.PRNGKey(0)
    k_feat, k_lab = jax.random.split(key)
    features = jax.random.normal(k_feat, (batch, feat_dim), dtype=jnp.float32)
    labels = jax.random.randint(k_lab, (batch,), 0, num_classes, dtype=jnp.int32)

    loss, pos_mean, neg_mean = orthogonal_projection_loss(features, labels, gamma=gamma)
    jax.block_until_ready((loss, pos_mean, neg_mean))

    # Pure-JAX reference, same math as the PyTorch forward (default config).
    f = features / jnp.maximum(
        jnp.sqrt(jnp.sum(features * features, axis=1, keepdims=True)), 1e-12)
    dot_prod = jnp.matmul(f, f.T, precision=lax.Precision.HIGHEST)
    same = labels[:, None] == labels[None, :]
    eye = jnp.eye(batch, dtype=bool)
    ref_mask_pos = jnp.logical_and(same, jnp.logical_not(eye)).astype(jnp.float32)
    ref_mask_neg = jnp.logical_not(same).astype(jnp.float32)
    ref_pos = jnp.sum(ref_mask_pos * dot_prod) / (jnp.sum(ref_mask_pos) + 1e-6)
    ref_neg = jnp.sum(jnp.abs(ref_mask_neg * dot_prod)) / (jnp.sum(ref_mask_neg) + 1e-6)
    ref_loss = 1.0 - ref_pos + gamma * ref_neg

    assert jnp.allclose(loss, ref_loss, rtol=1e-4, atol=1e-4), (loss, ref_loss)
    assert jnp.allclose(pos_mean, ref_pos, rtol=1e-4, atol=1e-4), (pos_mean, ref_pos)
    assert jnp.allclose(neg_mean, ref_neg, rtol=1e-4, atol=1e-4), (neg_mean, ref_neg)
    print("KERNEL_OK")
</pallas_src>

<mosaic_0001>
module attributes {stable_mosaic.version = 11 : i64} {
  func.func @kernel(%arg0: i32, %arg1: memref<128x32xf32, #tpu.memory_space<any>>, %arg2: memref<128x1xi32, #tpu.memory_space<vmem>>, %arg3: memref<1x128xi32, #tpu.memory_space<vmem>>, %arg4: memref<1x1xf32, #tpu.memory_space<vmem>>, %arg5: memref<1x1xf32, #tpu.memory_space<vmem>>, %arg6: memref<1x1xf32, #tpu.memory_space<vmem>>, %arg7: memref<128x32xf32, #tpu.memory_space<vmem>>, %arg8: memref<1x128xf32, #tpu.memory_space<vmem>>, %arg9: memref<1x128xf32, #tpu.memory_space<vmem>>, %arg10: memref<1x128xf32, #tpu.memory_space<vmem>>, %arg11: memref<1x1xf32, #tpu.memory_space<vmem>>) attributes {dimension_semantics = [#tpu.dimension_semantics<arbitrary>], iteration_bounds = array<i64: 1>, scalar_prefetch = 0 : i64, scratch_operands = 5 : i64, tpu.core_type = #tpu.core_type<tc>, window_params = [{}, {transform_indices = @transform_1, window_bounds = array<i64: 128, 1>}, {pipeline_mode = #tpu.pipeline_mode<synchronous>, transform_indices = @transform_2, window_bounds = array<i64: 1, 128>}, {pipeline_mode = #tpu.pipeline_mode<synchronous>, transform_indices = @transform_3, window_bounds = array<i64: 1, 1>}, {pipeline_mode = #tpu.pipeline_mode<synchronous>, transform_indices = @transform_4, window_bounds = array<i64: 1, 1>}, {pipeline_mode = #tpu.pipeline_mode<synchronous>, transform_indices = @transform_5, window_bounds = array<i64: 1, 1>}]} {
    %c0_i32 = arith.constant 0 : i32
    %0 = arith.cmpi eq, %arg0, %c0_i32 : i32
    %1 = arith.extui %0 : i1 to i32
    %c0_i32_0 = arith.constant 0 : i32
    %2 = arith.cmpi ne, %1, %c0_i32_0 : i32
    scf.if %2 {
      "tpu.region"() ({
        %63 = tpu.sem_alloc : memref<!tpu.dma_semaphore, #tpu.memory_space<semaphore_mem>>
        tpu.enqueue_dma source(%arg1 : memref<128x32xf32, #tpu.memory_space<any>>) target(%arg7 : memref<128x32xf32, #tpu.memory_space<vmem>>) target_semaphore(%63 : memref<!tpu.dma_semaphore, #tpu.memory_space<semaphore_mem>>)
        tpu.wait_dma2 semaphore(%63 : memref<!tpu.dma_semaphore, #tpu.memory_space<semaphore_mem>>) src(%arg1 : memref<128x32xf32, #tpu.memory_space<any>>) dst(%arg7 : memref<128x32xf32, #tpu.memory_space<vmem>>)
        tpu.yield
      }) : () -> ()
      %c0_28 = arith.constant 0 : index
      %c0_29 = arith.constant 0 : index
      %40 = vector.load %arg7[%c0_28, %c0_29] : memref<128x32xf32, #tpu.memory_space<vmem>>, vector<128x32xf32>
      %41 = arith.mulf %40, %40 : vector<128x32xf32>
      %cst_30 = arith.constant dense<0.000000e+00> : vector<128xf32>
      %42 = vector.multi_reduction <add>, %41, %cst_30 [1] : vector<128x32xf32> to vector<128xf32>
      %43 = vector.shape_cast %42 : vector<128xf32> to vector<128x1xf32>
      %44 = math.sqrt %43 : vector<128x1xf32>
      %cst_31 = arith.constant 9.99999996E-13 : f32
      %45 = vector.broadcast %cst_31 : f32 to vector<128x1xf32>
      %46 = arith.maximumf %44, %45 : vector<128x1xf32>
      %47 = vector.broadcast %46 : vector<128x1xf32> to vector<128x32xf32>
      %48 = arith.divf %40, %47 : vector<128x32xf32>
      %c0_32 = arith.constant 0 : index
      %c0_33 = arith.constant 0 : index
      %49 = vector.load %arg7[%c0_32, %c0_33] : memref<128x32xf32, #tpu.memory_space<vmem>>, vector<128x32xf32>
      tpu.vector_store %arg7[%c0_32, %c0_33], %48 {strides = array<i32>} : memref<128x32xf32, #tpu.memory_space<vmem>>, vector<128x32xf32>,
      %50 = arith.mulf %48, %48 : vector<128x32xf32>
      %51 = vector.shape_cast %50 : vector<128x32xf32> to vector<1x128x32xf32>
      %cst_34 = arith.constant dense<0.000000e+00> : vector<1xf32>
      %52 = vector.multi_reduction <add>, %51, %cst_34 [1, 2] : vector<1x128x32xf32> to vector<1xf32>
      %53 = vector.shape_cast %52 : vector<1xf32> to vector<1x1x1xf32>
      %54 = vector.extract %53[0, 0, 0] : f32 from vector<1x1x1xf32>
      %55 = vector.broadcast %54 : f32 to vector<1x1xf32>
      %c0_35 = arith.constant 0 : index
      %c0_36 = arith.constant 0 : index
      %56 = vector.load %arg11[%c0_35, %c0_36] : memref<1x1xf32, #tpu.memory_space<vmem>>, vector<1x1xf32>
      tpu.vector_store %arg11[%c0_35, %c0_36], %55 {strides = array<i32>} : memref<1x1xf32, #tpu.memory_space<vmem>>, vector<1x1xf32>,
      %cst_37 = arith.constant 0.000000e+00 : f32
      %57 = vector.broadcast %cst_37 : f32 to vector<1x128xf32>
      %c0_38 = arith.constant 0 : index
      %c0_39 = arith.constant 0 : index
      %58 = vector.load %arg8[%c0_38, %c0_39] : memref<1x128xf32, #tpu.memory_space<vmem>>, vector<1x128xf32>
      tpu.vector_store %arg8[%c0_38, %c0_39], %57 {strides = array<i32>} : memref<1x128xf32, #tpu.memory_space<vmem>>, vector<1x128xf32>,
      %cst_40 = arith.constant 0.000000e+00 : f32
      %59 = vector.broadcast %cst_40 : f32 to vector<1x128xf32>
      %c0_41 = arith.constant 0 : index
      %c0_42 = arith.constant 0 : index
      %60 = vector.load %arg9[%c0_41, %c0_42] : memref<1x128xf32, #tpu.memory_space<vmem>>, vector<1x128xf32>
      tpu.vector_store %arg9[%c0_41, %c0_42], %59 {strides = array<i32>} : memref<1x128xf32, #tpu.memory_space<vmem>>, vector<1x128xf32>,
      %cst_43 = arith.constant 0.000000e+00 : f32
      %61 = vector.broadcast %cst_43 : f32 to vector<1x128xf32>
      %c0_44 = arith.constant 0 : index
      %c0_45 = arith.constant 0 : index
      %62 = vector.load %arg10[%c0_44, %c0_45] : memref<1x128xf32, #tpu.memory_space<vmem>>, vector<1x128xf32>
      tpu.vector_store %arg10[%c0_44, %c0_45], %61 {strides = array<i32>} : memref<1x128xf32, #tpu.memory_space<vmem>>, vector<1x128xf32>,
    } else {
    }
    %c128_i32 = arith.constant 128 : i32
    %3 = arith.muli %arg0, %c128_i32 : i32
    %4 = tpu.assume_multiple %3, 128 : i32
    %5 = arith.index_cast %4 : i32 to index
    %c0 = arith.constant 0 : index
    %6 = vector.load %arg7[%5, %c0] : memref<128x32xf32, #tpu.memory_space<vmem>>, vector<128x32xf32>
    %c0_1 = arith.constant 0 : index
    %c0_2 = arith.constant 0 : index
    %7 = vector.load %arg7[%c0_1, %c0_2] : memref<128x32xf32, #tpu.memory_space<vmem>>, vector<128x32xf32>
    %cst = arith.constant dense<0.000000e+00> : vector<128x128xf32>
    %8 = tpu.matmul %6, %7, %cst {dimension_numbers = #tpu.dot_dimension_numbers<[1], [1], [0], [0], [0, 0, 1, 0], [], []>} : vector<128x32xf32>, vector<128x32xf32>, vector<128x128xf32> -> vector<128x128xf32>
    %c0_3 = arith.constant 0 : index
    %c0_4 = arith.constant 0 : index
    %9 = vector.load %arg2[%c0_3, %c0_4] : memref<128x1xi32, #tpu.memory_space<vmem>>, vector<128x1xi32>
    %c0_5 = arith.constant 0 : index
    %c0_6 = arith.constant 0 : index
    %10 = vector.load %arg3[%c0_5, %c0_6] : memref<1x128xi32, #tpu.memory_space<vmem>>, vector<1x128xi32>
    %11 = vector.broadcast %9 : vector<128x1xi32> to vector<128x128xi32>
    %12 = vector.broadcast %10 : vector<1x128xi32> to vector<128x128xi32>
    %13 = arith.cmpi eq, %11, %12 : vector<128x128xi32>
    %c0_7 = arith.constant 0 : index
    %c0_8 = arith.constant 0 : index
    %14 = vector.load %arg8[%c0_7, %c0_8] : memref<1x128xf32, #tpu.memory_space<vmem>>, vector<1x128xf32>
    %cst_9 = arith.constant 0.000000e+00 : f32
    %15 = vector.broadcast %cst_9 : f32 to vector<128x128xf32>
    %16 = arith.select %13, %8, %15 : vector<128x128xi1>, vector<128x128xf32>
    %cst_10 = arith.constant dense<0.000000e+00> : vector<128xf32>
    %17 = vector.multi_reduction <add>, %16, %cst_10 [0] : vector<128x128xf32> to vector<128xf32>
    %18 = vector.shape_cast %17 : vector<128xf32> to vector<1x128xf32>
    %19 = arith.addf %14, %18 : vector<1x128xf32>
    %c0_11 = arith.constant 0 : index
    %c0_12 = arith.constant 0 : index
    %20 = vector.load %arg8[%c0_11, %c0_12] : memref<1x128xf32, #tpu.memory_space<vmem>>, vector<1x128xf32>
    tpu.vector_store %arg8[%c0_11, %c0_12], %19 {strides = array<i32>} : memref<1x128xf32, #tpu.memory_space<vmem>>, vector<1x128xf32>,
    %c0_13 = arith.constant 0 : index
    %c0_14 = arith.constant 0 : index
    %21 = vector.load %arg9[%c0_13, %c0_14] : memref<1x128xf32, #tpu.memory_space<vmem>>, vector<1x128xf32>
    %22 = math.absf %8 : vector<128x128xf32>
    %cst_15 = arith.constant 0.000000e+00 : f32
    %23 = vector.broadcast %cst_15 : f32 to vector<128x128xf32>
    %24 = arith.select %13, %23, %22 : vector<128x128xi1>, vector<128x128xf32>
    %cst_16 = arith.constant dense<0.000000e+00> : vector<128xf32>
    %25 = vector.multi_reduction <add>, %24, %cst_16 [0] : vector<128x128xf32> to vector<128xf32>
    %26 = vector.shape_cast %25 : vector<128xf32> to vector<1x128xf32>
    %27 = arith.addf %21, %26 : vector<1x128xf32>
    %c0_17 = arith.constant 0 : index
    %c0_18 = arith.constant 0 : index
    %28 = vector.load %arg9[%c0_17, %c0_18] : memref<1x128xf32, #tpu.memory_space<vmem>>, vector<1x128xf32>
    tpu.vector_store %arg9[%c0_17, %c0_18], %27 {strides = array<i32>} : memref<1x128xf32, #tpu.memory_space<vmem>>, vector<1x128xf32>,
    %c0_19 = arith.constant 0 : index
    %c0_20 = arith.constant 0 : index
    %29 = vector.load %arg10[%c0_19, %c0_20] : memref<1x128xf32, #tpu.memory_space<vmem>>, vector<1x128xf32>
    %cst_21 = arith.constant 1.000000e+00 : f32
    %cst_22 = arith.constant 0.000000e+00 : f32
    %30 = vector.broadcast %cst_21 : f32 to vector<128x128xf32>
    %31 = vector.broadcast %cst_22 : f32 to vector<128x128xf32>
    %32 = arith.select %13, %30, %31 : vector<128x128xi1>, vector<128x128xf32>
    %cst_23 = arith.constant dense<0.000000e+00> : vector<128xf32>
    %33 = vector.multi_reduction <add>, %32, %cst_23 [0] : vector<128x128xf32> to vector<128xf32>
    %34 = vector.shape_cast %33 : vector<128xf32> to vector<1x128xf32>
    %35 = arith.addf %29, %34 : vector<1x128xf32>
    %c0_24 = arith.constant 0 : index
    %c0_25 = arith.constant 0 : index
    %36 = vector.load %arg10[%c0_24, %c0_25] : memref<1x128xf32, #tpu.memory_space<vmem>>, vector<1x128xf32>
    tpu.vector_store %arg10[%c0_24, %c0_25], %35 {strides = array<i32>} : memref<1x128xf32, #tpu.memory_space<vmem>>, vector<1x128xf32>,
    %c0_i32_26 = arith.constant 0 : i32
    %37 = arith.cmpi eq, %arg0, %c0_i32_26 : i32
    %38 = arith.extui %37 : i1 to i32
    %c0_i32_27 = arith.constant 0 : i32
    %39 = arith.cmpi ne, %38, %c0_i32_27 : i32
    scf.if %39 {
      %c0_28 = arith.constant 0 : index
      %c0_29 = arith.constant 0 : index
      %40 = vector.load %arg10[%c0_28, %c0_29] : memref<1x128xf32, #tpu.memory_space<vmem>>, vector<1x128xf32>
      %41 = vector.shape_cast %40 : vector<1x128xf32> to vector<1x1x128xf32>
      %cst_30 = arith.constant dense<0.000000e+00> : vector<1xf32>
      %42 = vector.multi_reduction <add>, %41, %cst_30 [1, 2] : vector<1x1x128xf32> to vector<1xf32>
      %43 = vector.shape_cast %42 : vector<1xf32> to vector<1x1x1xf32>
      %44 = vector.extract %43[0, 0, 0] : f32 from vector<1x1x1xf32>
      %45 = vector.broadcast %44 : f32 to vector<1x1xf32>
      %cst_31 = arith.constant 1.280000e+02 : f32
      %46 = vector.broadcast %cst_31 : f32 to vector<1x1xf32>
      %47 = arith.subf %45, %46 : vector<1x1xf32>
      %cst_32 = arith.constant 1.840000e+02 : f32
      %48 = vector.broadcast %cst_32 : f32 to vector<1x1xf32>
      %49 = arith.subf %48, %45 : vector<1x1xf32>
      %c0_33 = arith.constant 0 : index
      %c0_34 = arith.constant 0 : index
      %50 = vector.load %arg8[%c0_33, %c0_34] : memref<1x128xf32, #tpu.memory_space<vmem>>, vector<1x128xf32>
      %51 = vector.shape_cast %50 : vector<1x128xf32> to vector<1x1x128xf32>
      %cst_35 = arith.constant dense<0.000000e+00> : vector<1xf32>
      %52 = vector.multi_reduction <add>, %51, %cst_35 [1, 2] : vector<1x1x128xf32> to vector<1xf32>
      %53 = vector.shape_cast %52 : vector<1xf32> to vector<1x1x1xf32>
      %54 = vector.extract %53[0, 0, 0] : f32 from vector<1x1x1xf32>
      %55 = vector.broadcast %54 : f32 to vector<1x1xf32>
      %c0_36 = arith.constant 0 : index
      %c0_37 = arith.constant 0 : index
      %56 = vector.load %arg11[%c0_36, %c0_37] : memref<1x1xf32, #tpu.memory_space<vmem>>, vector<1x1xf32>
      %57 = arith.subf %55, %56 : vector<1x1xf32>
      %c0_38 = arith.constant 0 : index
      %c0_39 = arith.constant 0 : index
      %58 = vector.load %arg9[%c0_38, %c0_39] : memref<1x128xf32, #tpu.memory_space<vmem>>, vector<1x128xf32>
      %59 = vector.shape_cast %58 : vector<1x128xf32> to vector<1x1x128xf32>
      %cst_40 = arith.constant dense<0.000000e+00> : vector<1xf32>
      %60 = vector.multi_reduction <add>, %59, %cst_40 [1, 2] : vector<1x1x128xf32> to vector<1xf32>
      %61 = vector.shape_cast %60 : vector<1xf32> to vector<1x1x1xf32>
      %62 = vector.extract %61[0, 0, 0] : f32 from vector<1x1x1xf32>
      %63 = vector.broadcast %62 : f32 to vector<1x1xf32>
      %cst_41 = arith.constant 9.99999997E-7 : f32
      %64 = vector.broadcast %cst_41 : f32 to vector<1x1xf32>
      %65 = arith.addf %47, %64 : vector<1x1xf32>
      %66 = arith.divf %57, %65 : vector<1x1xf32>
      %cst_42 = arith.constant 9.99999997E-7 : f32
      %67 = vector.broadcast %cst_42 : f32 to vector<1x1xf32>
      %68 = arith.addf %49, %67 : vector<1x1xf32>
      %69 = arith.divf %63, %68 : vector<1x1xf32>
      %c0_43 = arith.constant 0 : index
      %c0_44 = arith.constant 0 : index
      %70 = vector.load %arg5[%c0_43, %c0_44] : memref<1x1xf32, #tpu.memory_space<vmem>>, vector<1x1xf32>
      tpu.vector_store %arg5[%c0_43, %c0_44], %66 {strides = array<i32>} : memref<1x1xf32, #tpu.memory_space<vmem>>, vector<1x1xf32>,
      %c0_45 = arith.constant 0 : index
      %c0_46 = arith.constant 0 : index
      %71 = vector.load %arg6[%c0_45, %c0_46] : memref<1x1xf32, #tpu.memory_space<vmem>>, vector<1x1xf32>
      tpu.vector_store %arg6[%c0_45, %c0_46], %69 {strides = array<i32>} : memref<1x1xf32, #tpu.memory_space<vmem>>, vector<1x1xf32>,
      %cst_47 = arith.constant 1.000000e+00 : f32
      %72 = vector.broadcast %cst_47 : f32 to vector<1x1xf32>
      %73 = arith.subf %72, %66 : vector<1x1xf32>
      %cst_48 = arith.constant 2.000000e+00 : f32
      %74 = vector.broadcast %cst_48 : f32 to vector<1x1xf32>
      %75 = arith.mulf %74, %69 : vector<1x1xf32>
      %76 = arith.addf %73, %75 : vector<1x1xf32>
      %c0_49 = arith.constant 0 : index
      %c0_50 = arith.constant 0 : index
      %77 = vector.load %arg4[%c0_49, %c0_50] : memref<1x1xf32, #tpu.memory_space<vmem>>, vector<1x1xf32>
      tpu.vector_store %arg4[%c0_49, %c0_50], %76 {strides = array<i32>} : memref<1x1xf32, #tpu.memory_space<vmem>>, vector<1x1xf32>,
    } else {
    }
    return
  }
  func.func @transform_1(%arg0: i32) -> (i32, i32) {
    %c0_i32 = arith.constant 0 : i32
    %c0_i32_0 = arith.constant 0 : i32
    return %arg0, %c0_i32 : i32, i32
  }
  func.func @transform_2(%arg0: i32) -> (i32, i32) {
    %c0_i32 = arith.constant 0 : i32
    %c0_i32_0 = arith.constant 0 : i32
    %c0_i32_1 = arith.constant 0 : i32
    return %c0_i32, %c0_i32_0 : i32, i32
  }
  func.func @transform_3(%arg0: i32) -> (i32, i32) {
    %c0_i32 = arith.constant 0 : i32
    %c0_i32_0 = arith.constant 0 : i32
    %c0_i32_1 = arith.constant 0 : i32
    return %c0_i32, %c0_i32_0 : i32, i32
  }
  func.func @transform_4(%arg0: i32) -> (i32, i32) {
    %c0_i32 = arith.constant 0 : i32
    %c0_i32_0 = arith.constant 0 : i32
    %c0_i32_1 = arith.constant 0 : i32
    return %c0_i32, %c0_i32_0 : i32, i32
  }
  func.func @transform_5(%arg0: i32) -> (i32, i32) {
    %c0_i32 = arith.constant 0 : i32
    %c0_i32_0 = arith.constant 0 : i32
    %c0_i32_1 = arith.constant 0 : i32
    return %c0_i32, %c0_i32_0 : i32, i32
  }
}

</mosaic_0001>

<llo_original>
// kernel: tpu_custom_call.1
$region0: #{tpu_custom_call.1}
  #allocation0 [shape = 'u32[]', space=smem, size = 0x4, offset = 0x4, fixed_abs, tag = 'smem constant byte address 0x4 - core index']
  #allocation1 [shape = 'u32[144,128]{1,0:T(1,128)}', space=vmem, size = 0x12000, scoped, tag = 'internal scratch']
  #allocation2 [shape = 'f32[128,32]{1,0:T(8,128)}', space=vmem, size = 0x10000, scoped, tag = 'scratch operand']
  #allocation3 [shape = 'f32[1,128]{1,0:T(1,128)}', space=vmem, size = 0x200, scoped, tag = 'scratch operand']
  #allocation4 [shape = 'f32[1,128]{1,0:T(1,128)}', space=vmem, size = 0x200, scoped, tag = 'scratch operand']
  #allocation5 [shape = 'f32[1,128]{1,0:T(1,128)}', space=vmem, size = 0x200, scoped, tag = 'scratch operand']
  #allocation6 [shape = 'f32[1,1]{1,0:T(1,128)}', space=vmem, size = 0x200, scoped, tag = 'scratch operand']
  #allocation13 [shape = 's32[]', space=sflag, size = 0x4, offset = 0, fixed_abs, tag = 'sflag constant byte address 0x0 - dummy sync flag']
  %s0 = inlined_call_operand.vmem [shape: f32[128,32], index: 0, kind: input, shape index: {}]
  %s1 = inlined_call_operand.vmem [shape: s32[128,1], index: 1, kind: input, shape index: {}]
  %s2 = inlined_call_operand.vmem [shape: s32[1,128], index: 2, kind: input, shape index: {}]
  %s3 = inlined_call_operand.hbm [shape: f32[1,1], index: 3, kind: output, shape index: {0}]
  %s4 = inlined_call_operand.hbm [shape: f32[1,1], index: 4, kind: output, shape index: {1}]
  %s5 = inlined_call_operand.hbm [shape: f32[1,1], index: 5, kind: output, shape index: {2}]
  %6 = xla_tuple %s3, %s4, %s5
  %s7 = sld [smem:[#allocation0]]
  $region77: #{tpu_custom_call.1} parent=0
    _
  %s9 = ssub.s32 1, %s7
  %s10 = scalar_select 0, %s9, %s7
  $region1: #{tpu_custom_call.1} parent=0
    #allocation7 [shape = 'u8[512]{0}', space=vmem, size = 0x400, scoped, tag = 'output window, operand 0, single buffered']
    #allocation8 [shape = 's32[1]{0}', space=sflag, size = 0x4, scoped, tag = 'scoped memory for tpu_custom_call.1']
    #allocation9 [shape = 'u8[512]{0}', space=vmem, size = 0x400, scoped, tag = 'output window, operand 1, single buffered']
    #allocation10 [shape = 's32[1]{0}', space=sflag, size = 0x4, scoped, tag = 'scoped memory for tpu_custom_call.1']
    #allocation11 [shape = 'u8[512]{0}', space=vmem, size = 0x400, scoped, tag = 'output window, operand 2, single buffered']
    %11 = vsyncpa [#allocation8], 0
    %12 = vsyncpa [#allocation10], 0
    // Predicated region
    $region2: #{tpu_custom_call.1} parent=1 // pred_check
      _
    $region3: #{tpu_custom_call.1} parent=1 // pred_check_branch
      %14 = sbr.rel (0) target = $region5
    $region4: #{tpu_custom_call.1} parent=1 // pred_region
      _
    $region5: #{tpu_custom_call.1} parent=1 // pred_fallthru
      _
    // Predicated region
    $region6: #{tpu_custom_call.1} parent=1 // pred_check
      _
    $region7: #{tpu_custom_call.1} parent=1 // pred_check_branch
      %16 = sbr.rel (0) target = $region9
    $region8: #{tpu_custom_call.1} parent=1 // pred_region
      _
    $region9: #{tpu_custom_call.1} parent=1 // pred_fallthru
      _
    %p17 = scmp.eq.s32.totalorder 0, 0
    // Predicated region
    $region10: #{tpu_custom_call.1} parent=1 // pred_check
      %p18 = pneg %p17
    $region11: #{tpu_custom_call.1} parent=1 // pred_check_branch
      %20 = sbr.rel (%p18) target = $region13
    $region12: #{tpu_custom_call.1} parent=1 // pred_region
      $region14: #{tpu_custom_call.1} parent=12
        #allocation12 [shape = 's32[1]{0}', space=sflag, size = 0x4, scoped, tag = 'scoped memory for tpu_custom_call.1']
        %p22 = scmp.lt.u32.totalorder 128, 8
        %p23 = pneg %p22
        // Predicated region
        $region15: #{tpu_custom_call.1} parent=14 // pred_check
          _
        $region16: #{tpu_custom_call.1} parent=14 // pred_check_branch
          %25 = sbr.rel (%p22) target = $region18
        $region17: #{tpu_custom_call.1} parent=14 // pred_region
          %s40 = sand.u32 128, 7
          %p41 = scmp.eq.s32.totalorder %s40, 0
          // Predicated region
          $region30: #{tpu_custom_call.1} parent=17 // pred_check
            %p42 = pneg %p41
          $region31: #{tpu_custom_call.1} parent=17 // pred_check_branch
            %44 = sbr.rel (%p42) target = $region33
          $region32: #{tpu_custom_call.1} parent=17 // pred_region
            loop: start=0, step=1, limit=1
            $region34: #{tpu_custom_call.1} parent=32 // loop_pre_header
              _
            $region35: #{tpu_custom_call.1} parent=32 // loop_header
              %s46 = sphi 0, %s50
              %p47 = scmp.ge.s32.totalorder %s46, 1
              %s51 = sphi %s0, %s0
              %s52 = sphi [#allocation2], [#allocation2]
            $region36: #{tpu_custom_call.1} parent=32 // loop_header_branch
              %49 = sbr.rel (%p47) target = $region40
            $region37: #{tpu_custom_call.1} parent=32 // loop_body
              %v53 = vld [vmem:[%s51] sm:$0xff]
              %54 = vst [vmem:[%s52] sm:$0xff] %v53
              %v55 = vld [vmem:[%s51 + $0x8] sm:$0xff]
              %56 = vst [vmem:[%s52 + $0x8] sm:$0xff] %v55
              %v57 = vld [vmem:[%s51 + $0x10] sm:$0xff]
              %58 = vst [vmem:[%s52 + $0x10] sm:$0xff] %v57
              %v59 = vld [vmem:[%s51 + $0x18] sm:$0xff]
              %60 = vst [vmem:[%s52 + $0x18] sm:$0xff] %v59
              %v61 = vld [vmem:[%s51 + $0x20] sm:$0xff]
              %62 = vst [vmem:[%s52 + $0x20] sm:$0xff] %v61
              %v63 = vld [vmem:[%s51 + $0x28] sm:$0xff]
              %64 = vst [vmem:[%s52 + $0x28] sm:$0xff] %v63
              %v65 = vld [vmem:[%s51 + $0x30] sm:$0xff]
              %66 = vst [vmem:[%s52 + $0x30] sm:$0xff] %v65
              %v67 = vld [vmem:[%s51 + $0x38] sm:$0xff]
              %68 = vst [vmem:[%s52 + $0x38] sm:$0xff] %v67
              %v69 = vld [vmem:[%s51 + $0x40] sm:$0xff]
              %70 = vst [vmem:[%s52 + $0x40] sm:$0xff] %v69
              %v71 = vld [vmem:[%s51 + $0x48] sm:$0xff]
              %72 = vst [vmem:[%s52 + $0x48] sm:$0xff] %v71
              %v73 = vld [vmem:[%s51 + $0x50] sm:$0xff]
              %74 = vst [vmem:[%s52 + $0x50] sm:$0xff] %v73
              %v75 = vld [vmem:[%s51 + $0x58] sm:$0xff]
              %76 = vst [vmem:[%s52 + $0x58] sm:$0xff] %v75
              %v77 = vld [vmem:[%s51 + $0x60] sm:$0xff]
              %78 = vst [vmem:[%s52 + $0x60] sm:$0xff] %v77
              %v79 = vld [vmem:[%s51 + $0x68] sm:$0xff]
              %80 = vst [vmem:[%s52 + $0x68] sm:$0xff] %v79
              %v81 = vld [vmem:[%s51 + $0x70] sm:$0xff]
              %82 = vst [vmem:[%s52 + $0x70] sm:$0xff] %v81
              %v83 = vld [vmem:[%s51 + $0x78] sm:$0xff]
              %84 = vst [vmem:[%s52 + $0x78] sm:$0xff] %v83
            $region38: #{tpu_custom_call.1} parent=32 // loop_footer
              %s50 = sadd.s32 1, %s46
            $region39: #{tpu_custom_call.1} parent=32 // loop_footer_branch
              %45 = sbr.rel target = $region35
            $region40: #{tpu_custom_call.1} parent=32 // loop_exit
              _
          $region33: #{tpu_custom_call.1} parent=17 // pred_fallthru
            _
          %p85 = pneg %p41
          // Predicated region
          $region41: #{tpu_custom_call.1} parent=17 // pred_check
            _
          $region42: #{tpu_custom_call.1} parent=17 // pred_check_branch
            %87 = sbr.rel (%p41) target = $region44
          $region43: #{tpu_custom_call.1} parent=17 // pred_region
            %s88 = sand.u32 128, 7
          $region44: #{tpu_custom_call.1} parent=17 // pred_fallthru
            _
        $region18: #{tpu_custom_call.1} parent=14 // pred_fallthru
          _
        // Predicated region
        $region19: #{tpu_custom_call.1} parent=14 // pred_check
          %p26 = pneg %p22
        $region20: #{tpu_custom_call.1} parent=14 // pred_check_branch
          %28 = sbr.rel (%p26) target = $region22
        $region21: #{tpu_custom_call.1} parent=14 // pred_region
          %s29 = sshllo.u32 0, 128
          loop: start=0, step=1, limit=1
          $region23: #{tpu_custom_call.1} parent=21 // loop_pre_header
            _
          $region24: #{tpu_custom_call.1} parent=21 // loop_header
            %s31 = sphi 0, %s35
            %p32 = scmp.ge.s32.totalorder %s31, 1
            %s36 = sphi %s0, %s0
            %s37 = sphi [#allocation2], [#allocation2]
          $region25: #{tpu_custom_call.1} parent=21 // loop_header_branch
            %34 = sbr.rel (%p32) target = $region29
          $region26: #{tpu_custom_call.1} parent=21 // loop_body
            %v38 = vld [vmem:[%s36] sm:%s29]
            %39 = vst [vmem:[%s37] sm:%s29] %v38
          $region27: #{tpu_custom_call.1} parent=21 // loop_footer
            %s35 = sadd.s32 1, %s31
          $region28: #{tpu_custom_call.1} parent=21 // loop_footer_branch
            %30 = sbr.rel target = $region24
          $region29: #{tpu_custom_call.1} parent=21 // loop_exit
            _
        $region22: #{tpu_custom_call.1} parent=14 // pred_fallthru
          _
        // Predicated region
        $region45: #{tpu_custom_call.1} parent=14 // pred_check
          _
        $region46: #{tpu_custom_call.1} parent=14 // pred_check_branch
          %91 = sbr.rel (0) target = $region48
        $region47: #{tpu_custom_call.1} parent=14 // pred_region
          %92 = vsyncadd [#allocation12], 2048
        $region48: #{tpu_custom_call.1} parent=14 // pred_fallthru
          _
        %s93 = smul.u32 128, 1
        %s94 = sshll.u32 %s93, 4
        %95 = dma.done [#allocation12], %s94
      %v96 = vld [vmem:[#allocation2] sm:$0xff]
      %v97 = vld [vmem:[#allocation2 + $0x8] sm:$0xff]
      %v98 = vld [vmem:[#allocation2 + $0x10] sm:$0xff]
      %v99 = vld [vmem:[#allocation2 + $0x18] sm:$0xff]
      %v100 = vld [vmem:[#allocation2 + $0x20] sm:$0xff]
      %v101 = vld [vmem:[#allocation2 + $0x28] sm:$0xff]
      %v102 = vld [vmem:[#allocation2 + $0x30] sm:$0xff]
      %v103 = vld [vmem:[#allocation2 + $0x38] sm:$0xff]
      %v104 = vld [vmem:[#allocation2 + $0x40] sm:$0xff]
      %v105 = vld [vmem:[#allocation2 + $0x48] sm:$0xff]
      %v106 = vld [vmem:[#allocation2 + $0x50] sm:$0xff]
      %v107 = vld [vmem:[#allocation2 + $0x58] sm:$0xff]
      %v108 = vld [vmem:[#allocation2 + $0x60] sm:$0xff]
      %v109 = vld [vmem:[#allocation2 + $0x68] sm:$0xff]
      %v110 = vld [vmem:[#allocation2 + $0x70] sm:$0xff]
      %v111 = vld [vmem:[#allocation2 + $0x78] sm:$0xff]
      %v112 = vmul.f32 %v96, %v96
      %v113 = vmul.f32 %v97, %v97
      %v114 = vmul.f32 %v98, %v98
      %v115 = vmul.f32 %v99, %v99
      %v116 = vmul.f32 %v100, %v100
      %v117 = vmul.f32 %v101, %v101
      %v118 = vmul.f32 %v102, %v102
      %v119 = vmul.f32 %v103, %v103
      %v120 = vmul.f32 %v104, %v104
      %v121 = vmul.f32 %v105, %v105
      %v122 = vmul.f32 %v106, %v106
      %v123 = vmul.f32 %v107, %v107
      %v124 = vmul.f32 %v108, %v108
      %v125 = vmul.f32 %v109, %v109
      %v126 = vmul.f32 %v110, %v110
      %v127 = vmul.f32 %v111, %v111
      %vm128 = vcmask 261120
      %v129 = vsel %vm128, %v112, 0.0
      %130 = vadd.xlane.f32.xlu0 %v129
      %v131 = vpop.xlane.xlu0 %130
      %v132 = vsel %vm128, %v113, 0.0
      %133 = vadd.xlane.f32.xlu0 %v132
      %v134 = vpop.xlane.xlu0 %133
      %v135 = vsel %vm128, %v114, 0.0
      %136 = vadd.xlane.f32.xlu0 %v135
      %v137 = vpop.xlane.xlu0 %136
      %v138 = vsel %vm128, %v115, 0.0
      %139 = vadd.xlane.f32.xlu0 %v138
      %v140 = vpop.xlane.xlu0 %139
      %v141 = vsel %vm128, %v116, 0.0
      %142 = vadd.xlane.f32.xlu0 %v141
      %v143 = vpop.xlane.xlu0 %142
      %v144 = vsel %vm128, %v117, 0.0
      %145 = vadd.xlane.f32.xlu0 %v144
      %v146 = vpop.xlane.xlu0 %145
      %v147 = vsel %vm128, %v118, 0.0
      %148 = vadd.xlane.f32.xlu0 %v147
      %v149 = vpop.xlane.xlu0 %148
      %v150 = vsel %vm128, %v119, 0.0
      %151 = vadd.xlane.f32.xlu0 %v150
      %v152 = vpop.xlane.xlu0 %151
      %v153 = vsel %vm128, %v120, 0.0
      %154 = vadd.xlane.f32.xlu0 %v153
      %v155 = vpop.xlane.xlu0 %154
      %v156 = vsel %vm128, %v121, 0.0
      %157 = vadd.xlane.f32.xlu0 %v156
      %v158 = vpop.xlane.xlu0 %157
      %v159 = vsel %vm128, %v122, 0.0
      %160 = vadd.xlane.f32.xlu0 %v159
      %v161 = vpop.xlane.xlu0 %160
      %v162 = vsel %vm128, %v123, 0.0
      %163 = vadd.xlane.f32.xlu0 %v162
      %v164 = vpop.xlane.xlu0 %163
      %v165 = vsel %vm128, %v124, 0.0
      %166 = vadd.xlane.f32.xlu0 %v165
      %v167 = vpop.xlane.xlu0 %166
      %v168 = vsel %vm128, %v125, 0.0
      %169 = vadd.xlane.f32.xlu0 %v168
      %v170 = vpop.xlane.xlu0 %169
      %v171 = vsel %vm128, %v126, 0.0
      %172 = vadd.xlane.f32.xlu0 %v171
      %v173 = vpop.xlane.xlu0 %172
      %v174 = vsel %vm128, %v127, 0.0
      %175 = vadd.xlane.f32.xlu0 %v174
      %v176 = vpop.xlane.xlu0 %175
      %v177 = vrsqrt.pop %v131
      %v178 = vmul.f32 %v131, %v177
      %vm179 = vcmp.eq.f32.partialorder %v131, inf
      %v180 = vsel %vm179, %v131, %v178
      %vm181 = vcmp.eq.f32.partialorder %v131, 0.0
      %v182 = vand.u32 %v131, 2147483648
      %v183 = vsel %vm181, %v182, %v180
      %v184 = vrsqrt.pop %v134
      %v185 = vmul.f32 %v134, %v184
      %vm186 = vcmp.eq.f32.partialorder %v134, inf
      %v187 = vsel %vm186, %v134, %v185
      %vm188 = vcmp.eq.f32.partialorder %v134, 0.0
      %v189 = vand.u32 %v134, 2147483648
      %v190 = vsel %vm188, %v189, %v187
      %v191 = vrsqrt.pop %v137
      %v192 = vmul.f32 %v137, %v191
      %vm193 = vcmp.eq.f32.partialorder %v137, inf
      %v194 = vsel %vm193, %v137, %v192
      %vm195 = vcmp.eq.f32.partialorder %v137, 0.0
      %v196 = vand.u32 %v137, 2147483648
      %v197 = vsel %vm195, %v196, %v194
      %v198 = vrsqrt.pop %v140
      %v199 = vmul.f32 %v140, %v198
      %vm200 = vcmp.eq.f32.partialorder %v140, inf
      %v201 = vsel %vm200, %v140, %v199
      %vm202 = vcmp.eq.f32.partialorder %v140, 0.0
      %v203 = vand.u32 %v140, 2147483648
      %v204 = vsel %vm202, %v203, %v201
      %v205 = vrsqrt.pop %v143
      %v206 = vmul.f32 %v143, %v205
      %vm207 = vcmp.eq.f32.partialorder %v143, inf
      %v208 = vsel %vm207, %v143, %v206
      %vm209 = vcmp.eq.f32.partialorder %v143, 0.0
      %v210 = vand.u32 %v143, 2147483648
      %v211 = vsel %vm209, %v210, %v208
      %v212 = vrsqrt.pop %v146
      %v213 = vmul.f32 %v146, %v212
      %vm214 = vcmp.eq.f32.partialorder %v146, inf
      %v215 = vsel %vm214, %v146, %v213
      %vm216 = vcmp.eq.f32.partialorder %v146, 0.0
      %v217 = vand.u32 %v146, 2147483648
      %v218 = vsel %vm216, %v217, %v215
      %v219 = vrsqrt.pop %v149
      %v220 = vmul.f32 %v149, %v219
      %vm221 = vcmp.eq.f32.partialorder %v149, inf
      %v222 = vsel %vm221, %v149, %v220
      %vm223 = vcmp.eq.f32.partialorder %v149, 0.0
      %v224 = vand.u32 %v149, 2147483648
      %v225 = vsel %vm223, %v224, %v222
      %v226 = vrsqrt.pop %v152
      %v227 = vmul.f32 %v152, %v226
      %vm228 = vcmp.eq.f32.partialorder %v152, inf
      %v229 = vsel %vm228, %v152, %v227
      %vm230 = vcmp.eq.f32.partialorder %v152, 0.0
      %v231 = vand.u32 %v152, 2147483648
      %v232 = vsel %vm230, %v231, %v229
      %v233 = vrsqrt.pop %v155
      %v234 = vmul.f32 %v155, %v233
      %vm235 = vcmp.eq.f32.partialorder %v155, inf
      %v236 = vsel %vm235, %v155, %v234
      %vm237 = vcmp.eq.f32.partialorder %v155, 0.0
      %v238 = vand.u32 %v155, 2147483648
      %v239 = vsel %vm237, %v238, %v236
      %v240 = vrsqrt.pop %v158
      %v241 = vmul.f32 %v158, %v240
      %vm242 = vcmp.eq.f32.partialorder %v158, inf
      %v243 = vsel %vm242, %v158, %v241
      %vm244 = vcmp.eq.f32.partialorder %v158, 0.0
      %v245 = vand.u32 %v158, 2147483648
      %v246 = vsel %vm244, %v245, %v243
      %v247 = vrsqrt.pop %v161
      %v248 = vmul.f32 %v161, %v247
      %vm249 = vcmp.eq.f32.partialorder %v161, inf
      %v250 = vsel %vm249, %v161, %v248
      %vm251 = vcmp.eq.f32.partialorder %v161, 0.0
      %v252 = vand.u32 %v161, 2147483648
      %v253 = vsel %vm251, %v252, %v250
      %v254 = vrsqrt.pop %v164
      %v255 = vmul.f32 %v164, %v254
      %vm256 = vcmp.eq.f32.partialorder %v164, inf
      %v257 = vsel %vm256, %v164, %v255
      %vm258 = vcmp.eq.f32.partialorder %v164, 0.0
      %v259 = vand.u32 %v164, 2147483648
      %v260 = vsel %vm258, %v259, %v257
      %v261 = vrsqrt.pop %v167
      %v262 = vmul.f32 %v167, %v261
      %vm263 = vcmp.eq.f32.partialorder %v167, inf
      %v264 = vsel %vm263, %v167, %v262
      %vm265 = vcmp.eq.f32.partialorder %v167, 0.0
      %v266 = vand.u32 %v167, 2147483648
      %v267 = vsel %vm265, %v266, %v264
      %v268 = vrsqrt.pop %v170
      %v269 = vmul.f32 %v170, %v268
      %vm270 = vcmp.eq.f32.partialorder %v170, inf
      %v271 = vsel %vm270, %v170, %v269
      %vm272 = vcmp.eq.f32.partialorder %v170, 0.0
      %v273 = vand.u32 %v170, 2147483648
      %v274 = vsel %vm272, %v273, %v271
      %v275 = vrsqrt.pop %v173
      %v276 = vmul.f32 %v173, %v275
      %vm277 = vcmp.eq.f32.partialorder %v173, inf
      %v278 = vsel %vm277, %v173, %v276
      %vm279 = vcmp.eq.f32.partialorder %v173, 0.0
      %v280 = vand.u32 %v173, 2147483648
      %v281 = vsel %vm279, %v280, %v278
      %v282 = vrsqrt.pop %v176
      %v283 = vmul.f32 %v176, %v282
      %vm284 = vcmp.eq.f32.partialorder %v176, inf
      %v285 = vsel %vm284, %v176, %v283
      %vm286 = vcmp.eq.f32.partialorder %v176, 0.0
      %v287 = vand.u32 %v176, 2147483648
      %v288 = vsel %vm286, %v287, %v285
      %v289 = vmax.f32 %v183, 1e-12
      %v290 = vmax.f32 %v190, 1e-12
      %v291 = vmax.f32 %v197, 1e-12
      %v292 = vmax.f32 %v204, 1e-12
      %v293 = vmax.f32 %v211, 1e-12
      %v294 = vmax.f32 %v218, 1e-12
      %v295 = vmax.f32 %v225, 1e-12
      %v296 = vmax.f32 %v232, 1e-12
      %v297 = vmax.f32 %v239, 1e-12
      %v298 = vmax.f32 %v246, 1e-12
      %v299 = vmax.f32 %v253, 1e-12
      %v300 = vmax.f32 %v260, 1e-12
      %v301 = vmax.f32 %v267, 1e-12
      %v302 = vmax.f32 %v274, 1e-12
      %v303 = vmax.f32 %v281, 1e-12
      %v304 = vmax.f32 %v288, 1e-12
      %v305 = vrcp.pop %v289
      %v306 = vmul.f32 %v96, %v305
      %v307 = vrcp.pop %v290
      %v308 = vmul.f32 %v97, %v307
      %v309 = vrcp.pop %v291
      %v310 = vmul.f32 %v98, %v309
      %v311 = vrcp.pop %v292
      %v312 = vmul.f32 %v99, %v311
      %v313 = vrcp.pop %v293
      %v314 = vmul.f32 %v100, %v313
      %v315 = vrcp.pop %v294
      %v316 = vmul.f32 %v101, %v315
      %v317 = vrcp.pop %v295
      %v318 = vmul.f32 %v102, %v317
      %v319 = vrcp.pop %v296
      %v320 = vmul.f32 %v103, %v319
      %v321 = vrcp.pop %v297
      %v322 = vmul.f32 %v104, %v321
      %v323 = vrcp.pop %v298
      %v324 = vmul.f32 %v105, %v323
      %v325 = vrcp.pop %v299
      %v326 = vmul.f32 %v106, %v325
      %v327 = vrcp.pop %v300
      %v328 = vmul.f32 %v107, %v327
      %v329 = vrcp.pop %v301
      %v330 = vmul.f32 %v108, %v329
      %v331 = vrcp.pop %v302
      %v332 = vmul.f32 %v109, %v331
      %v333 = vrcp.pop %v303
      %v334 = vmul.f32 %v110, %v333
      %v335 = vrcp.pop %v304
      %v336 = vmul.f32 %v111, %v335
      %337 = vst.msk [vmem:[#allocation2] sm:$0xff] %vm128, %v306
      %338 = vst.msk [vmem:[#allocation2 + $0x8] sm:$0xff] %vm128, %v308
      %339 = vst.msk [vmem:[#allocation2 + $0x10] sm:$0xff] %vm128, %v310
      %340 = vst.msk [vmem:[#allocation2 + $0x18] sm:$0xff] %vm128, %v312
      %341 = vst.msk [vmem:[#allocation2 + $0x20] sm:$0xff] %vm128, %v314
      %342 = vst.msk [vmem:[#allocation2 + $0x28] sm:$0xff] %vm128, %v316
      %343 = vst.msk [vmem:[#allocation2 + $0x30] sm:$0xff] %vm128, %v318
      %344 = vst.msk [vmem:[#allocation2 + $0x38] sm:$0xff] %vm128, %v320
      %345 = vst.msk [vmem:[#allocation2 + $0x40] sm:$0xff] %vm128, %v322
      %346 = vst.msk [vmem:[#allocation2 + $0x48] sm:$0xff] %vm128, %v324
      %347 = vst.msk [vmem:[#allocation2 + $0x50] sm:$0xff] %vm128, %v326
      %348 = vst.msk [vmem:[#allocation2 + $0x58] sm:$0xff] %vm128, %v328
      %349 = vst.msk [vmem:[#allocation2 + $0x60] sm:$0xff] %vm128, %v330
      %350 = vst.msk [vmem:[#allocation2 + $0x68] sm:$0xff] %vm128, %v332
      %351 = vst.msk [vmem:[#allocation2 + $0x70] sm:$0xff] %vm128, %v334
      %352 = vst.msk [vmem:[#allocation2 + $0x78] sm:$0xff] %vm128, %v336
      %v353 = vmul.f32 %v306, %v306
      %v354 = vmul.f32 %v308, %v308
      %v355 = vmul.f32 %v310, %v310
      %v356 = vmul.f32 %v312, %v312
      %v357 = vmul.f32 %v314, %v314
      %v358 = vmul.f32 %v316, %v316
      %v359 = vmul.f32 %v318, %v318
      %v360 = vmul.f32 %v320, %v320
      %v361 = vmul.f32 %v322, %v322
      %v362 = vmul.f32 %v324, %v324
      %v363 = vmul.f32 %v326, %v326
      %v364 = vmul.f32 %v328, %v328
      %v365 = vmul.f32 %v330, %v330
      %v366 = vmul.f32 %v332, %v332
      %v367 = vmul.f32 %v334, %v334
      %v368 = vmul.f32 %v336, %v336
      %v369 = vsel %vm128, %v353, 0.0
      %v370 = vsel %vm128, %v354, 0.0
      %v371 = vadd.f32 %v369, %v370
      %v372 = vsel %vm128, %v355, 0.0
      %v373 = vadd.f32 %v371, %v372
      %v374 = vsel %vm128, %v356, 0.0
      %v375 = vadd.f32 %v373, %v374
      %v376 = vsel %vm128, %v357, 0.0
      %v377 = vadd.f32 %v375, %v376
      %v378 = vsel %vm128, %v358, 0.0
      %v379 = vadd.f32 %v377, %v378
      %v380 = vsel %vm128, %v359, 0.0
      %v381 = vadd.f32 %v379, %v380
      %v382 = vsel %vm128, %v360, 0.0
      %v383 = vadd.f32 %v381, %v382
      %v384 = vsel %vm128, %v361, 0.0
      %v385 = vadd.f32 %v383, %v384
      %v386 = vsel %vm128, %v362, 0.0
      %v387 = vadd.f32 %v385, %v386
      %v388 = vsel %vm128, %v363, 0.0
      %v389 = vadd.f32 %v387, %v388
      %v390 = vsel %vm128, %v364, 0.0
      %v391 = vadd.f32 %v389, %v390
      %v392 = vsel %vm128, %v365, 0.0
      %v393 = vadd.f32 %v391, %v392
      %v394 = vsel %vm128, %v366, 0.0
      %v395 = vadd.f32 %v393, %v394
      %v396 = vsel %vm128, %v367, 0.0
      %v397 = vadd.f32 %v395, %v396
      %v398 = vsel %vm128, %v368, 0.0
      %v399 = vadd.f32 %v397, %v398
      %400 = vadd.xlane.f32.xlu0 %v399
      %v401 = vpop.xlane.xlu0 %400
      %v402 = vrot.slane %v401, 4
      %v403 = vadd.f32 %v401, %v402
      %v404 = vrot.slane %v403, 2
      %v405 = vadd.f32 %v403, %v404
      %v406 = vrot.slane %v405, 1
      %v407 = vadd.f32 %v405, %v406
      %s408 = vtos %v407
      %v409 = vstv %s408
      %vm410 = vcmask 0
      %411 = vst.msk [vmem:[#allocation6] sm:$0x1] %vm410, %v409
      %412 = vst [vmem:[#allocation3] sm:$0x1] 0.0
      %413 = vst [vmem:[#allocation4] sm:$0x1] 0.0
      %414 = vst [vmem:[#allocation5] sm:$0x1] 0.0
    $region13: #{tpu_custom_call.1} parent=1 // pred_fallthru
      _
    %s415 = smul.u32 0, 128
    %s416 = scalar_lea.vmem [#allocation2], %s415
    %v417 = vld [vmem:[%s416] sm:$0xff]
    %v418 = vld [vmem:[%s416 + $0x8] sm:$0xff]
    %v419 = vld [vmem:[%s416 + $0x10] sm:$0xff]
    %v420 = vld [vmem:[%s416 + $0x18] sm:$0xff]
    %v421 = vld [vmem:[%s416 + $0x20] sm:$0xff]
    %v422 = vld [vmem:[%s416 + $0x28] sm:$0xff]
    %v423 = vld [vmem:[%s416 + $0x30] sm:$0xff]
    %v424 = vld [vmem:[%s416 + $0x38] sm:$0xff]
    %v425 = vld [vmem:[%s416 + $0x40] sm:$0xff]
    %v426 = vld [vmem:[%s416 + $0x48] sm:$0xff]
    %v427 = vld [vmem:[%s416 + $0x50] sm:$0xff]
    %v428 = vld [vmem:[%s416 + $0x58] sm:$0xff]
    %v429 = vld [vmem:[%s416 + $0x60] sm:$0xff]
    %v430 = vld [vmem:[%s416 + $0x68] sm:$0xff]
    %v431 = vld [vmem:[%s416 + $0x70] sm:$0xff]
    %v432 = vld [vmem:[%s416 + $0x78] sm:$0xff]
    %v433 = vld [vmem:[#allocation2] sm:$0xff]
    %v434 = vld [vmem:[#allocation2 + $0x8] sm:$0xff]
    %v435 = vld [vmem:[#allocation2 + $0x10] sm:$0xff]
    %v436 = vld [vmem:[#allocation2 + $0x18] sm:$0xff]
    %v437 = vld [vmem:[#allocation2 + $0x20] sm:$0xff]
    %v438 = vld [vmem:[#allocation2 + $0x28] sm:$0xff]
    %v439 = vld [vmem:[#allocation2 + $0x30] sm:$0xff]
    %v440 = vld [vmem:[#allocation2 + $0x38] sm:$0xff]
    %v441 = vld [vmem:[#allocation2 + $0x40] sm:$0xff]
    %v442 = vld [vmem:[#allocation2 + $0x48] sm:$0xff]
    %v443 = vld [vmem:[#allocation2 + $0x50] sm:$0xff]
    %v444 = vld [vmem:[#allocation2 + $0x58] sm:$0xff]
    %v445 = vld [vmem:[#allocation2 + $0x60] sm:$0xff]
    %v446 = vld [vmem:[#allocation2 + $0x68] sm:$0xff]
    %v447 = vld [vmem:[#allocation2 + $0x70] sm:$0xff]
    %v448 = vld [vmem:[#allocation2 + $0x78] sm:$0xff]
    %vm449 = vcmask 261120
    %v451 = vsel %vm449, %v417, 0
    %v454 = vsel %vm449, %v418, 0
    %v457 = vsel %vm449, %v419, 0
    %v460 = vsel %vm449, %v420, 0
    %v463 = vsel %vm449, %v421, 0
    %v466 = vsel %vm449, %v422, 0
    %v469 = vsel %vm449, %v423, 0
    %v472 = vsel %vm449, %v424, 0
    %v475 = vsel %vm449, %v425, 0
    %v478 = vsel %vm449, %v426, 0
    %v481 = vsel %vm449, %v427, 0
    %v484 = vsel %vm449, %v428, 0
    %v487 = vsel %vm449, %v429, 0
    %v490 = vsel %vm449, %v430, 0
    %v493 = vsel %vm449, %v431, 0
    %v496 = vsel %vm449, %v432, 0
    %v499 = vsel %vm449, %v433, 0
    %v502 = vsel %vm449, %v434, 0
    %v505 = vsel %vm449, %v435, 0
    %v508 = vsel %vm449, %v436, 0
    %v511 = vsel %vm449, %v437, 0
    %v514 = vsel %vm449, %v438, 0
    %v517 = vsel %vm449, %v439, 0
    %v520 = vsel %vm449, %v440, 0
    %v523 = vsel %vm449, %v441, 0
    %v526 = vsel %vm449, %v442, 0
    %v529 = vsel %vm449, %v443, 0
    %v532 = vsel %vm449, %v444, 0
    %v535 = vsel %vm449, %v445, 0
    %v538 = vsel %vm449, %v446, 0
    %v541 = vsel %vm449, %v447, 0
    %v544 = vsel %vm449, %v448, 0
    %546 = vmatprep.subr.mxu0 0.0
    %547 = vmatpush1.xpose.msra.mxu0 %v499
    %548 = vmatprep.subr.mxu0 0.0
    %549 = vmatpush1.xpose.msra.mxu0 %v502
    %550 = vmatprep.subr.mxu0 0.0
    %551 = vmatpush1.xpose.msra.mxu0 %v505
    %552 = vmatprep.subr.mxu0 0.0
    %553 = vmatpush1.xpose.msra.mxu0 %v508
    %554 = vmatprep.subr.mxu0 0.0
    %555 = vmatpush1.xpose.msra.mxu0 %v511
    %556 = vmatprep.subr.mxu0 0.0
    %557 = vmatpush1.xpose.msra.mxu0 %v514
    %558 = vmatprep.subr.mxu0 0.0
    %559 = vmatpush1.xpose.msra.mxu0 %v517
    %560 = vmatprep.subr.mxu0 0.0
    %561 = vmatpush1.xpose.msra.mxu0 %v520
    %562 = vmatprep.subr.mxu0 0.0
    %563 = vmatpush1.xpose.msra.mxu0 %v523
    %564 = vmatprep.subr.mxu0 0.0
    %565 = vmatpush1.xpose.msra.mxu0 %v526
    %566 = vmatprep.subr.mxu0 0.0
    %567 = vmatpush1.xpose.msra.mxu0 %v529
    %568 = vmatprep.subr.mxu0 0.0
    %569 = vmatpush1.xpose.msra.mxu0 %v532
    %570 = vmatprep.subr.mxu0 0.0
    %571 = vmatpush1.xpose.msra.mxu0 %v535
    %572 = vmatprep.subr.mxu0 0.0
    %573 = vmatpush1.xpose.msra.mxu0 %v538
    %574 = vmatprep.subr.mxu0 0.0
    %575 = vmatpush1.xpose.msra.mxu0 %v541
    %576 = vmatprep.subr.mxu0 0.0
    %577 = vmatpush1.xpose.msra.mxu0 %v544
    %578 = vmatprep.subr.mxu0 0.0
    %579 = vmatpush1.xpose.msra.mxu0 0.0
    %580 = vmatprep.subr.mxu0 0.0
    %581 = vmatpush1.xpose.msra.mxu0 0.0
    %582 = vmatprep.subr.mxu0 0.0
    %583 = vmatpush1.xpose.msra.mxu0 0.0
    %584 = vmatprep.subr.mxu0 0.0
    %585 = vmatpush1.xpose.msra.mxu0 0.0
    %586 = vmatprep.subr.mxu0 0.0
    %587 = vmatpush1.xpose.msra.mxu0 0.0
    %588 = vmatprep.subr.mxu0 0.0
    %589 = vmatpush1.xpose.msra.mxu0 0.0
    %590 = vmatprep.subr.mxu0 0.0
    %591 = vmatpush1.xpose.msra.mxu0 0.0
    %592 = vmatprep.subr.mxu0 0.0
    %593 = vmatpush1.xpose.msra.mxu0 0.0
    %594 = vmatprep.subr.mxu0 0.0
    %595 = vmatpush1.xpose.msra.mxu0 0.0
    %596 = vmatprep.subr.mxu0 0.0
    %597 = vmatpush1.xpose.msra.mxu0 0.0
    %598 = vmatprep.subr.mxu0 0.0
    %599 = vmatpush1.xpose.msra.mxu0 0.0
    %600 = vmatprep.subr.mxu0 0.0
    %601 = vmatpush1.xpose.msra.mxu0 0.0
    %602 = vmatprep.subr.mxu0 0.0
    %603 = vmatpush1.xpose.msra.mxu0 0.0
    %604 = vmatprep.subr.mxu0 0.0
    %605 = vmatpush1.xpose.msra.mxu0 0.0
    %606 = vmatprep.subr.mxu0 0.0
    %607 = vmatpush1.xpose.msra.mxu0 0.0
    %608 = vmatprep.subr.mxu0 0.0
    %609 = vmatpush1.xpose.msra.mxu0 0.0
    %610 = vmatprep.mubr.f32.mxu0 0.0
    %611 = vmatmul.mubr.f32.gmra.mrb[0].mxu0 %v451
    %v612 = vpop.f32.mrb[0].mxu0
    %v613 = vadd.f32 0.0, %v612
    %v614 = vpop.f32.mrb[0].mxu0
    %615 = vmatprep.mubr.f32.mxu0 0.0
    %616 = vmatmul.mubr.f32.gmra.mrb[0].mxu0 %v454
    %v617 = vpop.f32.mrb[0].mxu0
    %v618 = vadd.f32 0.0, %v617
    %v619 = vpop.f32.mrb[0].mxu0
    %620 = vmatprep.mubr.f32.mxu0 0.0
    %621 = vmatmul.mubr.f32.gmra.mrb[0].mxu0 %v457
    %v622 = vpop.f32.mrb[0].mxu0
    %v623 = vadd.f32 0.0, %v622
    %v624 = vpop.f32.mrb[0].mxu0
    %625 = vmatprep.mubr.f32.mxu0 0.0
    %626 = vmatmul.mubr.f32.gmra.mrb[0].mxu0 %v460
    %v627 = vpop.f32.mrb[0].mxu0
    %v628 = vadd.f32 0.0, %v627
    %v629 = vpop.f32.mrb[0].mxu0
    %630 = vmatprep.mubr.f32.mxu0 0.0
    %631 = vmatmul.mubr.f32.gmra.mrb[0].mxu0 %v463
    %v632 = vpop.f32.mrb[0].mxu0
    %v633 = vadd.f32 0.0, %v632
    %v634 = vpop.f32.mrb[0].mxu0
    %635 = vmatprep.mubr.f32.mxu0 0.0
    %636 = vmatmul.mubr.f32.gmra.mrb[0].mxu0 %v466
    %v637 = vpop.f32.mrb[0].mxu0
    %v638 = vadd.f32 0.0, %v637
    %v639 = vpop.f32.mrb[0].mxu0
    %640 = vmatprep.mubr.f32.mxu0 0.0
    %641 = vmatmul.mubr.f32.gmra.mrb[0].mxu0 %v469
    %v642 = vpop.f32.mrb[0].mxu0
    %v643 = vadd.f32 0.0, %v642
    %v644 = vpop.f32.mrb[0].mxu0
    %645 = vmatprep.mubr.f32.mxu0 0.0
    %646 = vmatmul.mubr.f32.gmra.mrb[0].mxu0 %v472
    %v647 = vpop.f32.mrb[0].mxu0
    %v648 = vadd.f32 0.0, %v647
    %v649 = vpop.f32.mrb[0].mxu0
    %650 = vmatprep.mubr.f32.mxu0 0.0
    %651 = vmatmul.mubr.f32.gmra.mrb[0].mxu0 %v475
    %v652 = vpop.f32.mrb[0].mxu0
    %v653 = vadd.f32 0.0, %v652
    %v654 = vpop.f32.mrb[0].mxu0
    %655 = vmatprep.mubr.f32.mxu0 0.0
    %656 = vmatmul.mubr.f32.gmra.mrb[0].mxu0 %v478
    %v657 = vpop.f32.mrb[0].mxu0
    %v658 = vadd.f32 0.0, %v657
    %v659 = vpop.f32.mrb[0].mxu0
    %660 = vmatprep.mubr.f32.mxu0 0.0
    %661 = vmatmul.mubr.f32.gmra.mrb[0].mxu0 %v481
    %v662 = vpop.f32.mrb[0].mxu0
    %v663 = vadd.f32 0.0, %v662
    %v664 = vpop.f32.mrb[0].mxu0
    %665 = vmatprep.mubr.f32.mxu0 0.0
    %666 = vmatmul.mubr.f32.gmra.mrb[0].mxu0 %v484
    %v667 = vpop.f32.mrb[0].mxu0
    %v668 = vadd.f32 0.0, %v667
    %v669 = vpop.f32.mrb[0].mxu0
    %670 = vmatprep.mubr.f32.mxu0 0.0
    %671 = vmatmul.mubr.f32.gmra.mrb[0].mxu0 %v487
    %v672 = vpop.f32.mrb[0].mxu0
    %v673 = vadd.f32 0.0, %v672
    %v674 = vpop.f32.mrb[0].mxu0
    %675 = vmatprep.mubr.f32.mxu0 0.0
    %676 = vmatmul.mubr.f32.gmra.mrb[0].mxu0 %v490
    %v677 = vpop.f32.mrb[0].mxu0
    %v678 = vadd.f32 0.0, %v677
    %v679 = vpop.f32.mrb[0].mxu0
    %680 = vmatprep.mubr.f32.mxu0 0.0
    %681 = vmatmul.mubr.f32.gmra.mrb[0].mxu0 %v493
    %v682 = vpop.f32.mrb[0].mxu0
    %v683 = vadd.f32 0.0, %v682
    %v684 = vpop.f32.mrb[0].mxu0
    %685 = vmatprep.mubr.f32.mxu0 0.0
    %686 = vmatmul.mubr.f32.gmra.mrb[0].mxu0 %v496
    %v687 = vpop.f32.mrb[0].mxu0
    %v688 = vadd.f32 0.0, %v687
    %v689 = vpop.f32.mrb[0].mxu0
    %690 = vdwg.mxu0
    %v691 = vld [vmem:[%s1] sm:$0xff]
    %v692 = vld [vmem:[%s1 + $0x8] sm:$0xff]
    %v693 = vld [vmem:[%s1 + $0x10] sm:$0xff]
    %v694 = vld [vmem:[%s1 + $0x18] sm:$0xff]
    %v695 = vld [vmem:[%s1 + $0x20] sm:$0xff]
    %v696 = vld [vmem:[%s1 + $0x28] sm:$0xff]
    %v697 = vld [vmem:[%s1 + $0x30] sm:$0xff]
    %v698 = vld [vmem:[%s1 + $0x38] sm:$0xff]
    %v699 = vld [vmem:[%s1 + $0x40] sm:$0xff]
    %v700 = vld [vmem:[%s1 + $0x48] sm:$0xff]
    %v701 = vld [vmem:[%s1 + $0x50] sm:$0xff]
    %v702 = vld [vmem:[%s1 + $0x58] sm:$0xff]
    %v703 = vld [vmem:[%s1 + $0x60] sm:$0xff]
    %v704 = vld [vmem:[%s1 + $0x68] sm:$0xff]
    %v705 = vld [vmem:[%s1 + $0x70] sm:$0xff]
    %v706 = vld [vmem:[%s1 + $0x78] sm:$0xff]
    %v707 = vld [vmem:[%s2] sm:$0x1]
    %708 = vset.pattern.permute.xlu0 0
    %709 = vperm.xlu0 %708, %v691
    %v710 = vpop.permute.xlu0 %709
    %711 = vset.pattern.permute.xlu0 0
    %712 = vperm.xlu0 %711, %v692
    %v713 = vpop.permute.xlu0 %712
    %714 = vset.pattern.permute.xlu0 0
    %715 = vperm.xlu0 %714, %v693
    %v716 = vpop.permute.xlu0 %715
    %717 = vset.pattern.permute.xlu0 0
    %718 = vperm.xlu0 %717, %v694
    %v719 = vpop.permute.xlu0 %718
    %720 = vset.pattern.permute.xlu0 0
    %721 = vperm.xlu0 %720, %v695
    %v722 = vpop.permute.xlu0 %721
    %723 = vset.pattern.permute.xlu0 0
    %724 = vperm.xlu0 %723, %v696
    %v725 = vpop.permute.xlu0 %724
    %726 = vset.pattern.permute.xlu0 0
    %727 = vperm.xlu0 %726, %v697
    %v728 = vpop.permute.xlu0 %727
    %729 = vset.pattern.permute.xlu0 0
    %730 = vperm.xlu0 %729, %v698
    %v731 = vpop.permute.xlu0 %730
    %732 = vset.pattern.permute.xlu0 0
    %733 = vperm.xlu0 %732, %v699
    %v734 = vpop.permute.xlu0 %733
    %735 = vset.pattern.permute.xlu0 0
    %736 = vperm.xlu0 %735, %v700
    %v737 = vpop.permute.xlu0 %736
    %738 = vset.pattern.permute.xlu0 0
    %739 = vperm.xlu0 %738, %v701
    %v740 = vpop.permute.xlu0 %739
    %741 = vset.pattern.permute.xlu0 0
    %742 = vperm.xlu0 %741, %v702
    %v743 = vpop.permute.xlu0 %742
    %744 = vset.pattern.permute.xlu0 0
    %745 = vperm.xlu0 %744, %v703
    %v746 = vpop.permute.xlu0 %745
    %747 = vset.pattern.permute.xlu0 0
    %748 = vperm.xlu0 %747, %v704
    %v749 = vpop.permute.xlu0 %748
    %750 = vset.pattern.permute.xlu0 0
    %751 = vperm.xlu0 %750, %v705
    %v752 = vpop.permute.xlu0 %751
    %753 = vset.pattern.permute.xlu0 0
    %754 = vperm.xlu0 %753, %v706
    %v755 = vpop.permute.xlu0 %754
    %v756 = vlaneseq
    %v757 = vshrl.u32 %v756, 7
    %v758 = vsub.s32 0, %v757
    %v759 = vrot.slane %v707, %v758
    %vm760 = vcmp.eq.s32.totalorder %v710, %v759
    %vm761 = vcmp.eq.s32.totalorder %v713, %v759
    %vm762 = vcmp.eq.s32.totalorder %v716, %v759
    %vm763 = vcmp.eq.s32.totalorder %v719, %v759
    %vm764 = vcmp.eq.s32.totalorder %v722, %v759
    %vm765 = vcmp.eq.s32.totalorder %v725, %v759
    %vm766 = vcmp.eq.s32.totalorder %v728, %v759
    %vm767 = vcmp.eq.s32.totalorder %v731, %v759
    %vm768 = vcmp.eq.s32.totalorder %v734, %v759
    %vm769 = vcmp.eq.s32.totalorder %v737, %v759
    %vm770 = vcmp.eq.s32.totalorder %v740, %v759
    %vm771 = vcmp.eq.s32.totalorder %v743, %v759
    %vm772 = vcmp.eq.s32.totalorder %v746, %v759
    %vm773 = vcmp.eq.s32.totalorder %v749, %v759
    %vm774 = vcmp.eq.s32.totalorder %v752, %v759
    %vm775 = vcmp.eq.s32.totalorder %v755, %v759
    %v776 = vld [vmem:[#allocation3] sm:$0x1]
    %v777 = vsel %vm760, %v613, 0.0
    %v778 = vsel %vm761, %v618, 0.0
    %v779 = vsel %vm762, %v623, 0.0
    %v780 = vsel %vm763, %v628, 0.0
    %v781 = vsel %vm764, %v633, 0.0
    %v782 = vsel %vm765, %v638, 0.0
    %v783 = vsel %vm766, %v643, 0.0
    %v784 = vsel %vm767, %v648, 0.0
    %v785 = vsel %vm768, %v653, 0.0
    %v786 = vsel %vm769, %v658, 0.0
    %v787 = vsel %vm770, %v663, 0.0
    %v788 = vsel %vm771, %v668, 0.0
    %v789 = vsel %vm772, %v673, 0.0
    %v790 = vsel %vm773, %v678, 0.0
    %v791 = vsel %vm774, %v683, 0.0
    %v792 = vsel %vm775, %v688, 0.0
    %v793 = vadd.f32 %v777, %v778
    %v794 = vadd.f32 %v793, %v779
    %v795 = vadd.f32 %v794, %v780
    %v796 = vadd.f32 %v795, %v781
    %v797 = vadd.f32 %v796, %v782
    %v798 = vadd.f32 %v797, %v783
    %v799 = vadd.f32 %v798, %v784
    %v800 = vadd.f32 %v799, %v785
    %v801 = vadd.f32 %v800, %v786
    %v802 = vadd.f32 %v801, %v787
    %v803 = vadd.f32 %v802, %v788
    %v804 = vadd.f32 %v803, %v789
    %v805 = vadd.f32 %v804, %v790
    %v806 = vadd.f32 %v805, %v791
    %v807 = vadd.f32 %v806, %v792
    %v808 = vrot.slane %v807, 4
    %v809 = vadd.f32 %v807, %v808
    %v810 = vrot.slane %v809, 2
    %v811 = vadd.f32 %v809, %v810
    %v812 = vrot.slane %v811, 1
    %v813 = vadd.f32 %v811, %v812
    %v814 = vadd.f32 %v776, %v813
    %815 = vst [vmem:[#allocation3] sm:$0x1] %v814
    %v816 = vld [vmem:[#allocation4] sm:$0x1]
    %v817 = vand.u32 2147483647, %v613
    %v818 = vand.u32 2147483647, %v618
    %v819 = vand.u32 2147483647, %v623
    %v820 = vand.u32 2147483647, %v628
    %v821 = vand.u32 2147483647, %v633
    %v822 = vand.u32 2147483647, %v638
    %v823 = vand.u32 2147483647, %v643
    %v824 = vand.u32 2147483647, %v648
    %v825 = vand.u32 2147483647, %v653
    %v826 = vand.u32 2147483647, %v658
    %v827 = vand.u32 2147483647, %v663
    %v828 = vand.u32 2147483647, %v668
    %v829 = vand.u32 2147483647, %v673
    %v830 = vand.u32 2147483647, %v678
    %v831 = vand.u32 2147483647, %v683
    %v832 = vand.u32 2147483647, %v688
    %v833 = vsel %vm760, 0.0, %v817
    %v834 = vsel %vm761, 0.0, %v818
    %v835 = vsel %vm762, 0.0, %v819
    %v836 = vsel %vm763, 0.0, %v820
    %v837 = vsel %vm764, 0.0, %v821
    %v838 = vsel %vm765, 0.0, %v822
    %v839 = vsel %vm766, 0.0, %v823
    %v840 = vsel %vm767, 0.0, %v824
    %v841 = vsel %vm768, 0.0, %v825
    %v842 = vsel %vm769, 0.0, %v826
    %v843 = vsel %vm770, 0.0, %v827
    %v844 = vsel %vm771, 0.0, %v828
    %v845 = vsel %vm772, 0.0, %v829
    %v846 = vsel %vm773, 0.0, %v830
    %v847 = vsel %vm774, 0.0, %v831
    %v848 = vsel %vm775, 0.0, %v832
    %v849 = vadd.f32 %v833, %v834
    %v850 = vadd.f32 %v849, %v835
    %v851 = vadd.f32 %v850, %v836
    %v852 = vadd.f32 %v851, %v837
    %v853 = vadd.f32 %v852, %v838
    %v854 = vadd.f32 %v853, %v839
    %v855 = vadd.f32 %v854, %v840
    %v856 = vadd.f32 %v855, %v841
    %v857 = vadd.f32 %v856, %v842
    %v858 = vadd.f32 %v857, %v843
    %v859 = vadd.f32 %v858, %v844
    %v860 = vadd.f32 %v859, %v845
    %v861 = vadd.f32 %v860, %v846
    %v862 = vadd.f32 %v861, %v847
    %v863 = vadd.f32 %v862, %v848
    %v864 = vrot.slane %v863, 4
    %v865 = vadd.f32 %v863, %v864
    %v866 = vrot.slane %v865, 2
    %v867 = vadd.f32 %v865, %v866
    %v868 = vrot.slane %v867, 1
    %v869 = vadd.f32 %v867, %v868
    %v870 = vadd.f32 %v816, %v869
    %871 = vst [vmem:[#allocation4] sm:$0x1] %v870
    %v872 = vld [vmem:[#allocation5] sm:$0x1]
    %v873 = vsel %vm760, 1.0, 0.0
    %v874 = vsel %vm761, 1.0, 0.0
    %v875 = vsel %vm762, 1.0, 0.0
    %v876 = vsel %vm763, 1.0, 0.0
    %v877 = vsel %vm764, 1.0, 0.0
    %v878 = vsel %vm765, 1.0, 0.0
    %v879 = vsel %vm766, 1.0, 0.0
    %v880 = vsel %vm767, 1.0, 0.0
    %v881 = vsel %vm768, 1.0, 0.0
    %v882 = vsel %vm769, 1.0, 0.0
    %v883 = vsel %vm770, 1.0, 0.0
    %v884 = vsel %vm771, 1.0, 0.0
    %v885 = vsel %vm772, 1.0, 0.0
    %v886 = vsel %vm773, 1.0, 0.0
    %v887 = vsel %vm774, 1.0, 0.0
    %v888 = vsel %vm775, 1.0, 0.0
    %v889 = vadd.f32 %v873, %v874
    %v890 = vadd.f32 %v889, %v875
    %v891 = vadd.f32 %v890, %v876
    %v892 = vadd.f32 %v891, %v877
    %v893 = vadd.f32 %v892, %v878
    %v894 = vadd.f32 %v893, %v879
    %v895 = vadd.f32 %v894, %v880
    %v896 = vadd.f32 %v895, %v881
    %v897 = vadd.f32 %v896, %v882
    %v898 = vadd.f32 %v897, %v883
    %v899 = vadd.f32 %v898, %v884
    %v900 = vadd.f32 %v899, %v885
    %v901 = vadd.f32 %v900, %v886
    %v902 = vadd.f32 %v901, %v887
    %v903 = vadd.f32 %v902, %v888
    %v904 = vrot.slane %v903, 4
    %v905 = vadd.f32 %v903, %v904
    %v906 = vrot.slane %v905, 2
    %v907 = vadd.f32 %v905, %v906
    %v908 = vrot.slane %v907, 1
    %v909 = vadd.f32 %v907, %v908
    %v910 = vadd.f32 %v872, %v909
    %911 = vst [vmem:[#allocation5] sm:$0x1] %v910
    // Predicated region
    $region49: #{tpu_custom_call.1} parent=1 // pred_check
      %p912 = pneg %p17
    $region50: #{tpu_custom_call.1} parent=1 // pred_check_branch
      %914 = sbr.rel (%p912) target = $region52
    $region51: #{tpu_custom_call.1} parent=1 // pred_region
      %v915 = vld [vmem:[#allocation5] sm:$0x1]
      %vm916 = vcmask 1040384
      %v917 = vsel %vm916, %v915, 0.0
      %918 = vadd.xlane.f32.xlu0 %v917
      %v919 = vpop.xlane.xlu0 %918
      %v920 = vrot.slane %v919, 4
      %v921 = vadd.f32 %v919, %v920
      %v922 = vrot.slane %v921, 2
      %v923 = vadd.f32 %v921, %v922
      %v924 = vrot.slane %v923, 1
      %v925 = vadd.f32 %v923, %v924
      %s926 = vtos %v925
      %v927 = vstv %s926
      %v928 = vsub.f32 %v927, 128.0
      %v929 = vsub.f32 184.0, %v927
      %v930 = vld [vmem:[#allocation3] sm:$0x1]
      %v931 = vsel %vm916, %v930, 0.0
      %932 = vadd.xlane.f32.xlu0 %v931
      %v933 = vpop.xlane.xlu0 %932
      %v934 = vrot.slane %v933, 4
      %v935 = vadd.f32 %v933, %v934
      %v936 = vrot.slane %v935, 2
      %v937 = vadd.f32 %v935, %v936
      %v938 = vrot.slane %v937, 1
      %v939 = vadd.f32 %v937, %v938
      %s940 = vtos %v939
      %v941 = vstv %s940
      %v942 = vld [vmem:[#allocation6] sm:$0x1]
      %v943 = vsub.f32 %v941, %v942
      %v944 = vld [vmem:[#allocation4] sm:$0x1]
      %v945 = vsel %vm916, %v944, 0.0
      %946 = vadd.xlane.f32.xlu0 %v945
      %v947 = vpop.xlane.xlu0 %946
      %v948 = vrot.slane %v947, 4
      %v949 = vadd.f32 %v947, %v948
      %v950 = vrot.slane %v949, 2
      %v951 = vadd.f32 %v949, %v950
      %v952 = vrot.slane %v951, 1
      %v953 = vadd.f32 %v951, %v952
      %s954 = vtos %v953
      %v955 = vstv %s954
      %v956 = vadd.f32 %v928, 1e-06
      %v957 = vrcp.pop %v956
      %v958 = vmul.f32 %v943, %v957
      %v959 = vadd.f32 %v929, 1e-06
      %v960 = vrcp.pop %v959
      %v961 = vmul.f32 %v955, %v960
      %vm962 = vcmask 0
      %963 = vst.msk [vmem:[#allocation9] sm:$0x1] %vm962, %v958
      %964 = vst.msk [vmem:[#allocation11] sm:$0x1] %vm962, %v961
      %v965 = vsub.f32 1.0, %v958
      %v966 = vmul.f32 %v961, 2.0
      %v967 = vadd.f32 %v965, %v966
      %968 = vst.msk [vmem:[#allocation7] sm:$0x1] %vm962, %v967
    $region52: #{tpu_custom_call.1} parent=1 // pred_fallthru
      _
    // Predicated region
    $region53: #{tpu_custom_call.1} parent=1 // pred_check
      _
    $region54: #{tpu_custom_call.1} parent=1 // pred_check_branch
      %970 = sbr.rel (0) target = $region56
    $region55: #{tpu_custom_call.1} parent=1 // pred_region
      %s972 = ssub.s32 16, 16
      %973 = vsyncadd [#allocation8], %s972
      %s975 = sshll.u32 [#allocation7], 4
      %s976 = int_to_ptr.vmem [resolvable:$true] %s975
      %978 = dma.vmem_to_hbm [thread:$0]  %s976, 16, %s3, [#allocation8]
    $region56: #{tpu_custom_call.1} parent=1 // pred_fallthru
      _
    // Predicated region
    $region57: #{tpu_custom_call.1} parent=1 // pred_check
      _
    $region58: #{tpu_custom_call.1} parent=1 // pred_check_branch
      %980 = sbr.rel (0) target = $region60
    $region59: #{tpu_custom_call.1} parent=1 // pred_region
      %s982 = ssub.s32 16, 16
      %983 = vsyncadd [#allocation10], %s982
      %s985 = sshll.u32 [#allocation9], 4
      %s986 = int_to_ptr.vmem [resolvable:$true] %s985
      %988 = dma.vmem_to_hbm [thread:$0]  %s986, 16, %s4, [#allocation10]
    $region60: #{tpu_custom_call.1} parent=1 // pred_fallthru
      _
    // Predicated region
    $region61: #{tpu_custom_call.1} parent=1 // pred_check
      _
    $region62: #{tpu_custom_call.1} parent=1 // pred_check_branch
      %990 = sbr.rel (0) target = $region64
    $region63: #{tpu_custom_call.1} parent=1 // pred_region
      %s992 = ssub.s32 16, 16
      %993 = vsyncadd [#allocation10], %s992
      %s995 = sshll.u32 [#allocation11], 4
      %s996 = int_to_ptr.vmem [resolvable:$true] %s995
      %998 = dma.vmem_to_hbm [thread:$0]  %s996, 16, %s5, [#allocation10]
    $region64: #{tpu_custom_call.1} parent=1 // pred_fallthru
      _
    // Predicated region
    $region65: #{tpu_custom_call.1} parent=1 // pred_check
      _
    $region66: #{tpu_custom_call.1} parent=1 // pred_check_branch
      %1000 = sbr.rel (0) target = $region68
    $region67: #{tpu_custom_call.1} parent=1 // pred_region
      %1001 = dma.done [#allocation8], 16
    $region68: #{tpu_custom_call.1} parent=1 // pred_fallthru
      _
    // Predicated region
    $region69: #{tpu_custom_call.1} parent=1 // pred_check
      _
    $region70: #{tpu_custom_call.1} parent=1 // pred_check_branch
      %1003 = sbr.rel (0) target = $region72
    $region71: #{tpu_custom_call.1} parent=1 // pred_region
      %1004 = dma.done [#allocation10], 16
    $region72: #{tpu_custom_call.1} parent=1 // pred_fallthru
      _
    // Predicated region
    $region73: #{tpu_custom_call.1} parent=1 // pred_check
      _
    $region74: #{tpu_custom_call.1} parent=1 // pred_check_branch
      %1006 = sbr.rel (0) target = $region76
    $region75: #{tpu_custom_call.1} parent=1 // pred_region
      %1007 = dma.done [#allocation10], 16
    $region76: #{tpu_custom_call.1} parent=1 // pred_fallthru
      _
    %1008 = vsyncpa [#allocation8], 1
    %1009 = vsyncpa [#allocation10], 1

</llo_original>
